<compile_context>
chip_gen: v7x
topology: tpu7x:2x2x1
jax: 0.10.0
libtpu: 0.0.40
codegen_flags: <defaults>
</compile_context>

<pallas_src>
import jax
import jax.numpy as jnp
import numpy as np
from jax.experimental import pallas as pl
from jax.experimental.pallas import tpu as pltpu


# ----------------------------------------------------------------------------
# host-side glue: align_corners=True bilinear interpolation matrix (out, in)
# ----------------------------------------------------------------------------
def interp_matrix(out_size: int, in_size: int) -> jnp.ndarray:
    if out_size == 1:
        src = jnp.zeros((1,), jnp.float32)
    else:
        src = jnp.arange(out_size, dtype=jnp.float32) * (in_size - 1) / (out_size - 1)
    i0 = jnp.clip(jnp.floor(src).astype(jnp.int32), 0, in_size - 1)
    i1 = jnp.clip(i0 + 1, 0, in_size - 1)
    frac = src - i0.astype(jnp.float32)
    m = (jax.nn.one_hot(i0, in_size, dtype=jnp.float32) * (1.0 - frac)[:, None]
         + jax.nn.one_hot(i1, in_size, dtype=jnp.float32) * frac[:, None])
    return m  # (out_size, in_size)


# ----------------------------------------------------------------------------
# fused kernel: per-branch (1x1 conv + bilinear resize) + final 1x1 fuse conv
# ----------------------------------------------------------------------------
def make_fused_kernel(n, chans, w_offsets, bias_off, fusew_off, fuseb_off):
    def kernel(sp_ref, *refs):
        # refs layout:
        #   x_0..x_{n-1}   (Bt, C_i, H_i*W_i)   VMEM, native dtype
        #   kt_0..kt_{n-1} (H_i*W_i, Ho*Wo)     VMEM, Kron(Wh, Ww)^T
        #   out            (Bt, n+1, Ho*Wo)     VMEM out (branches 0..n-1, fuse at n)
        xs = refs[:n]
        kts = refs[n:2 * n]
        out_ref = refs[2 * n]

        bt = out_ref.shape[0]
        howo = out_ref.shape[2]

        acc = jnp.full((bt, howo), sp_ref[fuseb_off], dtype=jnp.float32)  # fuse bias
        for i in range(n):
            c_i = chans[i]
            hw = xs[i].shape[2]
            # 1x1 conv (C_i -> 1): VPU weighted sum over channels + conv bias.
            # TODO(synk): for large C (production PoolNet, C=128..512) replace this
            # unrolled VPU sum with a (Bt, C)@(C, H*W)-style MXU contraction.
            y = jnp.full((bt, hw), sp_ref[bias_off + i], dtype=jnp.float32)
            for c in range(c_i):
                y = y + sp_ref[w_offsets[i] + c] * xs[i][:, c, :].astype(jnp.float32)
            # bilinear resize (both axes fused): one lane-dense MXU matmul,
            # batch on the sublane axis, Ho*Wo=lane axis.
            z = jnp.dot(y.astype(kts[i].dtype), kts[i][...],
                        preferred_element_type=jnp.float32)          # (Bt, Ho*Wo)
            out_ref[:, i, :] = z.astype(out_ref.dtype)
            acc = acc + sp_ref[fusew_off + i] * z                     # fuse 1x1 conv
        out_ref[:, n, :] = acc.astype(out_ref.dtype)

    return kernel


# ----------------------------------------------------------------------------
# FuseLayer1 forward
# ----------------------------------------------------------------------------
def fuse_layer1_forward(list_x, x_size, trans_params, fuse_params, deep_sup=True):
    n = len(list_x)
    B = list_x[0].shape[0]
    Ho, Wo = int(x_size[2]), int(x_size[3])
    HoWo = Ho * Wo
    fw, fb = fuse_params
    act_dtype = list_x[0].dtype  # keep activations in their native dtype (bf16-friendly)

    xs, kts, chans, hws = [], [], [], []
    w_scalar_chunks, w_offsets = [], []
    off = 0
    for x_i, (w_i, _b_i) in zip(list_x, trans_params):
        _, C, H, W = x_i.shape
        chans.append(C)
        hws.append(H * W)
        xs.append(x_i.reshape(B, C, H * W))                       # lane axis = H*W
        wh = interp_matrix(Ho, H)                                  # (Ho, H)
        ww = interp_matrix(Wo, W)                                  # (Wo, W)
        # TODO(synk): Kron fusion only for small output maps; at production spatial
        # sizes fall back to two separate (row, column) interpolation matmuls.
        kts.append(jnp.kron(wh, ww).T.astype(act_dtype))           # (H*W, Ho*Wo)
        w_offsets.append(off)
        w_scalar_chunks.append(w_i.reshape(-1).astype(jnp.float32))
        off += C
    bias_off = off
    fusew_off = off + n
    fuseb_off = off + 2 * n

    biases = jnp.stack([b_i.reshape(()).astype(jnp.float32) for _, b_i in trans_params])
    params = jnp.concatenate(
        w_scalar_chunks
        + [biases, fw.reshape(-1).astype(jnp.float32), fb.reshape(-1).astype(jnp.float32)])

    # --- batch-blocked grid, sized against a v7x-safe VMEM budget ------------
    itemsize = jnp.dtype(act_dtype).itemsize
    per_batch_bytes = (sum(c * hw for c, hw in zip(chans, hws)) * itemsize
                       + (n + 1) * HoWo * 4)
    weight_bytes = sum(hw * HoWo for hw in hws) * itemsize
    VMEM_BUDGET = 40 << 20  # conservative vs. v7x's 64 MiB physical VMEM
    bt = 1
    for cand in range(1, B + 1):
        if B % cand:
            continue
        if 2 * cand * per_batch_bytes + weight_bytes > VMEM_BUDGET:
            continue
        if B >= 2 and B // cand < 2:      # keep grid >= 2 so both v7x TCs get work
            continue
        bt = cand
    grid = (B // bt,)
    vmem_limit = int(min(max(2 * bt * per_batch_bytes + weight_bytes + (2 << 20),
                             16 << 20), 48 << 20))

    in_specs = (
        [pl.BlockSpec((bt, c, hw), lambda g, sp: (g, 0, 0))
         for c, hw in zip(chans, hws)]
        + [pl.BlockSpec(k.shape, lambda g, sp: (0, 0)) for k in kts]
    )
    out_specs = pl.BlockSpec((bt, n + 1, HoWo), lambda g, sp: (g, 0, 0))
    out_shape = jax.ShapeDtypeStruct((B, n + 1, HoWo), jnp.float32)

    # advisory cost estimate
    flops = 0
    bytes_accessed = 0
    for c, hw in zip(chans, hws):
        flops += B * (2 * c * hw + 2 * hw * HoWo)
        bytes_accessed += B * c * hw * itemsize + hw * HoWo * itemsize
    flops += B * 2 * n * HoWo
    bytes_accessed += 4 * B * (n + 1) * HoWo

    stacked = pl.pallas_call(
        make_fused_kernel(n, tuple(chans), tuple(w_offsets),
                          bias_off, fusew_off, fuseb_off),
        out_shape=out_shape,
        grid_spec=pltpu.PrefetchScalarGridSpec(
            num_scalar_prefetch=1,
            grid=grid,
            in_specs=in_specs,
            out_specs=out_specs,
        ),
        compiler_params=pltpu.CompilerParams(
            dimension_semantics=("parallel",),
            vmem_limit_bytes=vmem_limit),
        cost_estimate=pl.CostEstimate(flops=int(flops), transcendentals=0,
                                      bytes_accessed=int(bytes_accessed)),
    )(params, *xs, *kts)

    stacked = stacked.reshape(B, n + 1, Ho, Wo)
    up_x = [stacked[:, i:i + 1] for i in range(n)]
    out_fuse = stacked[:, n:n + 1]
    if deep_sup:
        return [out_fuse, up_x]
    return [out_fuse]


# ----------------------------------------------------------------------------
# pure-JAX reference (1x1 conv + bias, bilinear resize, concat, 1x1 fuse conv)
# ----------------------------------------------------------------------------
def _reference(list_x, x_size, trans_params, fuse_params):
    Ho, Wo = x_size[2], x_size[3]
    up_x = []
    for x_i, (w_i, b_i) in zip(list_x, trans_params):
        _, C, H, W = x_i.shape
        y = jnp.einsum('bchw,c->bhw', x_i.astype(jnp.float32),
                       w_i.reshape(-1).astype(jnp.float32)) + b_i.reshape(())
        wh = interp_matrix(Ho, H)
        ww = interp_matrix(Wo, W)
        z = jnp.einsum('oh,bhw,pw->bop', wh, y, ww)
        up_x.append(z[:, None])
    stacked = jnp.concatenate(up_x, axis=1)
    fw, fb = fuse_params
    out_fuse = (jnp.einsum('bnhw,n->bhw', stacked, fw.reshape(-1))[:, None]
                + fb.reshape(()))
    return out_fuse, up_x


if __name__ == "__main__":
    key = jax.random.PRNGKey(0)
    list_k = [4, 8]                    # two branches with 4 and 8 input channels
    deep_sup = True
    B = 2
    x_size = (B, 1, 16, 16)            # target spatial size comes from x_size[2:]

    # inputs at different spatial resolutions (typical for PoolNet fusion)
    k_in = jax.random.split(key, 8)
    x0 = jax.random.normal(k_in[0], (B, list_k[0], 8, 8), jnp.float32)
    x1 = jax.random.normal(k_in[1], (B, list_k[1], 16, 16), jnp.float32)
    list_x = [x0, x1]

    # deterministic parameter init (Conv2d(C, 1, 1, 1) shapes)
    trans_params = []
    for i, c in enumerate(list_k):
        w = jax.random.normal(k_in[2 + i], (1, c, 1, 1), jnp.float32) * 0.1
        b = jax.random.normal(k_in[4 + i], (1,), jnp.float32) * 0.1
        trans_params.append((w, b))
    fuse_w = jax.random.normal(k_in[6], (1, len(list_k), 1, 1), jnp.float32) * 0.1
    fuse_b = jax.random.normal(k_in[7], (1,), jnp.float32) * 0.1
    fuse_params = (fuse_w, fuse_b)

    out = fuse_layer1_forward(list_x, x_size, trans_params, fuse_params, deep_sup)
    out_fuse, out_all = out[0], out[1]
    jax.block_until_ready(out_fuse)
    for u in out_all:
        jax.block_until_ready(u)

    # correctness check against pure-JAX reference
    ref_fuse, ref_up = _reference(list_x, x_size, trans_params, fuse_params)
    np.testing.assert_allclose(np.asarray(out_fuse), np.asarray(ref_fuse),
                               rtol=1e-4, atol=1e-5)
    for u, r in zip(out_all, ref_up):
        np.testing.assert_allclose(np.asarray(u), np.asarray(r),
                                   rtol=1e-4, atol=1e-5)

    assert out_fuse.shape == (B, 1, 16, 16)
    for u in out_all:
        assert u.shape == (B, 1, 16, 16)
    print("KERNEL_OK")
</pallas_src>

<mosaic_0001>
module attributes {stable_mosaic.version = 11 : i64} {
  func.func @kernel(%arg0: i32, %arg1: memref<17xf32, #tpu.memory_space<smem>>, %arg2: memref<1x4x64xf32, #tpu.memory_space<vmem>>, %arg3: memref<1x8x256xf32, #tpu.memory_space<vmem>>, %arg4: memref<64x256xf32, #tpu.memory_space<vmem>>, %arg5: memref<256x256xf32, #tpu.memory_space<vmem>>, %arg6: memref<1x3x256xf32, #tpu.memory_space<vmem>>) attributes {dimension_semantics = [#tpu.dimension_semantics<parallel>], iteration_bounds = array<i64: 2>, scalar_prefetch = 1 : i64, scratch_operands = 0 : i64, tpu.core_type = #tpu.core_type<tc>, window_params = [{transform_indices = @transform_0, window_bounds = array<i64: 1, 4, 64>}, {transform_indices = @transform_1, window_bounds = array<i64: 1, 8, 256>}, {pipeline_mode = #tpu.pipeline_mode<synchronous>, transform_indices = @transform_2, window_bounds = array<i64: 64, 256>}, {pipeline_mode = #tpu.pipeline_mode<synchronous>, transform_indices = @transform_3, window_bounds = array<i64: 256, 256>}, {transform_indices = @transform_4, window_bounds = array<i64: 1, 3, 256>}]} {
    %c16 = arith.constant 16 : index
    %0 = memref.load %arg1[%c16] : memref<17xf32, #tpu.memory_space<smem>>
    %1 = vector.broadcast %0 : f32 to vector<1x256xf32>
    %c12 = arith.constant 12 : index
    %2 = memref.load %arg1[%c12] : memref<17xf32, #tpu.memory_space<smem>>
    %3 = vector.broadcast %2 : f32 to vector<1x64xf32>
    %c0 = arith.constant 0 : index
    %4 = memref.load %arg1[%c0] : memref<17xf32, #tpu.memory_space<smem>>
    %c0_0 = arith.constant 0 : index
    %c0_1 = arith.constant 0 : index
    %c0_2 = arith.constant 0 : index
    %5 = vector.load %arg2[%c0_0, %c0_1, %c0_2] : memref<1x4x64xf32, #tpu.memory_space<vmem>>, vector<1x1x64xf32>
    %6 = vector.shape_cast %5 : vector<1x1x64xf32> to vector<1x64xf32>
    %7 = vector.broadcast %4 : f32 to vector<1x64xf32>
    %8 = arith.mulf %7, %6 : vector<1x64xf32>
    %9 = arith.addf %3, %8 : vector<1x64xf32>
    %c1 = arith.constant 1 : index
    %10 = memref.load %arg1[%c1] : memref<17xf32, #tpu.memory_space<smem>>
    %c0_3 = arith.constant 0 : index
    %c1_4 = arith.constant 1 : index
    %c0_5 = arith.constant 0 : index
    %11 = vector.load %arg2[%c0_3, %c1_4, %c0_5] : memref<1x4x64xf32, #tpu.memory_space<vmem>>, vector<1x1x64xf32>
    %12 = vector.shape_cast %11 : vector<1x1x64xf32> to vector<1x64xf32>
    %13 = vector.broadcast %10 : f32 to vector<1x64xf32>
    %14 = arith.mulf %13, %12 : vector<1x64xf32>
    %15 = arith.addf %9, %14 : vector<1x64xf32>
    %c2 = arith.constant 2 : index
    %16 = memref.load %arg1[%c2] : memref<17xf32, #tpu.memory_space<smem>>
    %c0_6 = arith.constant 0 : index
    %c2_7 = arith.constant 2 : index
    %c0_8 = arith.constant 0 : index
    %17 = vector.load %arg2[%c0_6, %c2_7, %c0_8] : memref<1x4x64xf32, #tpu.memory_space<vmem>>, vector<1x1x64xf32>
    %18 = vector.shape_cast %17 : vector<1x1x64xf32> to vector<1x64xf32>
    %19 = vector.broadcast %16 : f32 to vector<1x64xf32>
    %20 = arith.mulf %19, %18 : vector<1x64xf32>
    %21 = arith.addf %15, %20 : vector<1x64xf32>
    %c3 = arith.constant 3 : index
    %22 = memref.load %arg1[%c3] : memref<17xf32, #tpu.memory_space<smem>>
    %c0_9 = arith.constant 0 : index
    %c3_10 = arith.constant 3 : index
    %c0_11 = arith.constant 0 : index
    %23 = vector.load %arg2[%c0_9, %c3_10, %c0_11] : memref<1x4x64xf32, #tpu.memory_space<vmem>>, vector<1x1x64xf32>
    %24 = vector.shape_cast %23 : vector<1x1x64xf32> to vector<1x64xf32>
    %25 = vector.broadcast %22 : f32 to vector<1x64xf32>
    %26 = arith.mulf %25, %24 : vector<1x64xf32>
    %27 = arith.addf %21, %26 : vector<1x64xf32>
    %c0_12 = arith.constant 0 : index
    %c0_13 = arith.constant 0 : index
    %28 = vector.load %arg4[%c0_12, %c0_13] : memref<64x256xf32, #tpu.memory_space<vmem>>, vector<64x256xf32>
    %cst = arith.constant dense<0.000000e+00> : vector<1x256xf32>
    %29 = tpu.matmul %27, %28, %cst {dimension_numbers = #tpu.dot_dimension_numbers<[1], [0], [0], [1], [0, 0, 1, 1], [], []>} : vector<1x64xf32>, vector<64x256xf32>, vector<1x256xf32> -> vector<1x256xf32>
    %c0_14 = arith.constant 0 : index
    %c0_15 = arith.constant 0 : index
    %c0_16 = arith.constant 0 : index
    %30 = vector.load %arg6[%c0_14, %c0_15, %c0_16] : memref<1x3x256xf32, #tpu.memory_space<vmem>>, vector<1x1x256xf32>
    %31 = vector.shape_cast %30 : vector<1x1x256xf32> to vector<1x256xf32>
    %32 = vector.shape_cast %29 : vector<1x256xf32> to vector<1x1x256xf32>
    tpu.vector_store %arg6[%c0_14, %c0_15, %c0_16], %32 {strides = array<i32>} : memref<1x3x256xf32, #tpu.memory_space<vmem>>, vector<1x1x256xf32>,
    %c14 = arith.constant 14 : index
    %33 = memref.load %arg1[%c14] : memref<17xf32, #tpu.memory_space<smem>>
    %34 = vector.broadcast %33 : f32 to vector<1x256xf32>
    %35 = arith.mulf %34, %29 : vector<1x256xf32>
    %36 = arith.addf %1, %35 : vector<1x256xf32>
    %c13 = arith.constant 13 : index
    %37 = memref.load %arg1[%c13] : memref<17xf32, #tpu.memory_space<smem>>
    %38 = vector.broadcast %37 : f32 to vector<1x256xf32>
    %c4 = arith.constant 4 : index
    %39 = memref.load %arg1[%c4] : memref<17xf32, #tpu.memory_space<smem>>
    %c0_17 = arith.constant 0 : index
    %c0_18 = arith.constant 0 : index
    %c0_19 = arith.constant 0 : index
    %40 = vector.load %arg3[%c0_17, %c0_18, %c0_19] : memref<1x8x256xf32, #tpu.memory_space<vmem>>, vector<1x1x256xf32>
    %41 = vector.shape_cast %40 : vector<1x1x256xf32> to vector<1x256xf32>
    %42 = vector.broadcast %39 : f32 to vector<1x256xf32>
    %43 = arith.mulf %42, %41 : vector<1x256xf32>
    %44 = arith.addf %38, %43 : vector<1x256xf32>
    %c5 = arith.constant 5 : index
    %45 = memref.load %arg1[%c5] : memref<17xf32, #tpu.memory_space<smem>>
    %c0_20 = arith.constant 0 : index
    %c1_21 = arith.constant 1 : index
    %c0_22 = arith.constant 0 : index
    %46 = vector.load %arg3[%c0_20, %c1_21, %c0_22] : memref<1x8x256xf32, #tpu.memory_space<vmem>>, vector<1x1x256xf32>
    %47 = vector.shape_cast %46 : vector<1x1x256xf32> to vector<1x256xf32>
    %48 = vector.broadcast %45 : f32 to vector<1x256xf32>
    %49 = arith.mulf %48, %47 : vector<1x256xf32>
    %50 = arith.addf %44, %49 : vector<1x256xf32>
    %c6 = arith.constant 6 : index
    %51 = memref.load %arg1[%c6] : memref<17xf32, #tpu.memory_space<smem>>
    %c0_23 = arith.constant 0 : index
    %c2_24 = arith.constant 2 : index
    %c0_25 = arith.constant 0 : index
    %52 = vector.load %arg3[%c0_23, %c2_24, %c0_25] : memref<1x8x256xf32, #tpu.memory_space<vmem>>, vector<1x1x256xf32>
    %53 = vector.shape_cast %52 : vector<1x1x256xf32> to vector<1x256xf32>
    %54 = vector.broadcast %51 : f32 to vector<1x256xf32>
    %55 = arith.mulf %54, %53 : vector<1x256xf32>
    %56 = arith.addf %50, %55 : vector<1x256xf32>
    %c7 = arith.constant 7 : index
    %57 = memref.load %arg1[%c7] : memref<17xf32, #tpu.memory_space<smem>>
    %c0_26 = arith.constant 0 : index
    %c3_27 = arith.constant 3 : index
    %c0_28 = arith.constant 0 : index
    %58 = vector.load %arg3[%c0_26, %c3_27, %c0_28] : memref<1x8x256xf32, #tpu.memory_space<vmem>>, vector<1x1x256xf32>
    %59 = vector.shape_cast %58 : vector<1x1x256xf32> to vector<1x256xf32>
    %60 = vector.broadcast %57 : f32 to vector<1x256xf32>
    %61 = arith.mulf %60, %59 : vector<1x256xf32>
    %62 = arith.addf %56, %61 : vector<1x256xf32>
    %c8 = arith.constant 8 : index
    %63 = memref.load %arg1[%c8] : memref<17xf32, #tpu.memory_space<smem>>
    %c0_29 = arith.constant 0 : index
    %c4_30 = arith.constant 4 : index
    %c0_31 = arith.constant 0 : index
    %64 = vector.load %arg3[%c0_29, %c4_30, %c0_31] : memref<1x8x256xf32, #tpu.memory_space<vmem>>, vector<1x1x256xf32>
    %65 = vector.shape_cast %64 : vector<1x1x256xf32> to vector<1x256xf32>
    %66 = vector.broadcast %63 : f32 to vector<1x256xf32>
    %67 = arith.mulf %66, %65 : vector<1x256xf32>
    %68 = arith.addf %62, %67 : vector<1x256xf32>
    %c9 = arith.constant 9 : index
    %69 = memref.load %arg1[%c9] : memref<17xf32, #tpu.memory_space<smem>>
    %c0_32 = arith.constant 0 : index
    %c5_33 = arith.constant 5 : index
    %c0_34 = arith.constant 0 : index
    %70 = vector.load %arg3[%c0_32, %c5_33, %c0_34] : memref<1x8x256xf32, #tpu.memory_space<vmem>>, vector<1x1x256xf32>
    %71 = vector.shape_cast %70 : vector<1x1x256xf32> to vector<1x256xf32>
    %72 = vector.broadcast %69 : f32 to vector<1x256xf32>
    %73 = arith.mulf %72, %71 : vector<1x256xf32>
    %74 = arith.addf %68, %73 : vector<1x256xf32>
    %c10 = arith.constant 10 : index
    %75 = memref.load %arg1[%c10] : memref<17xf32, #tpu.memory_space<smem>>
    %c0_35 = arith.constant 0 : index
    %c6_36 = arith.constant 6 : index
    %c0_37 = arith.constant 0 : index
    %76 = vector.load %arg3[%c0_35, %c6_36, %c0_37] : memref<1x8x256xf32, #tpu.memory_space<vmem>>, vector<1x1x256xf32>
    %77 = vector.shape_cast %76 : vector<1x1x256xf32> to vector<1x256xf32>
    %78 = vector.broadcast %75 : f32 to vector<1x256xf32>
    %79 = arith.mulf %78, %77 : vector<1x256xf32>
    %80 = arith.addf %74, %79 : vector<1x256xf32>
    %c11 = arith.constant 11 : index
    %81 = memref.load %arg1[%c11] : memref<17xf32, #tpu.memory_space<smem>>
    %c0_38 = arith.constant 0 : index
    %c7_39 = arith.constant 7 : index
    %c0_40 = arith.constant 0 : index
    %82 = vector.load %arg3[%c0_38, %c7_39, %c0_40] : memref<1x8x256xf32, #tpu.memory_space<vmem>>, vector<1x1x256xf32>
    %83 = vector.shape_cast %82 : vector<1x1x256xf32> to vector<1x256xf32>
    %84 = vector.broadcast %81 : f32 to vector<1x256xf32>
    %85 = arith.mulf %84, %83 : vector<1x256xf32>
    %86 = arith.addf %80, %85 : vector<1x256xf32>
    %c0_41 = arith.constant 0 : index
    %c0_42 = arith.constant 0 : index
    %87 = vector.load %arg5[%c0_41, %c0_42] : memref<256x256xf32, #tpu.memory_space<vmem>>, vector<256x256xf32>
    %cst_43 = arith.constant dense<0.000000e+00> : vector<1x256xf32>
    %88 = tpu.matmul %86, %87, %cst_43 {dimension_numbers = #tpu.dot_dimension_numbers<[1], [0], [0], [1], [0, 0, 1, 1], [], []>} : vector<1x256xf32>, vector<256x256xf32>, vector<1x256xf32> -> vector<1x256xf32>
    %c0_44 = arith.constant 0 : index
    %c1_45 = arith.constant 1 : index
    %c0_46 = arith.constant 0 : index
    %89 = vector.load %arg6[%c0_44, %c1_45, %c0_46] : memref<1x3x256xf32, #tpu.memory_space<vmem>>, vector<1x1x256xf32>
    %90 = vector.shape_cast %89 : vector<1x1x256xf32> to vector<1x256xf32>
    %91 = vector.shape_cast %88 : vector<1x256xf32> to vector<1x1x256xf32>
    tpu.vector_store %arg6[%c0_44, %c1_45, %c0_46], %91 {strides = array<i32>} : memref<1x3x256xf32, #tpu.memory_space<vmem>>, vector<1x1x256xf32>,
    %c15 = arith.constant 15 : index
    %92 = memref.load %arg1[%c15] : memref<17xf32, #tpu.memory_space<smem>>
    %93 = vector.broadcast %92 : f32 to vector<1x256xf32>
    %94 = arith.mulf %93, %88 : vector<1x256xf32>
    %95 = arith.addf %36, %94 : vector<1x256xf32>
    %c0_47 = arith.constant 0 : index
    %c2_48 = arith.constant 2 : index
    %c0_49 = arith.constant 0 : index
    %96 = vector.load %arg6[%c0_47, %c2_48, %c0_49] : memref<1x3x256xf32, #tpu.memory_space<vmem>>, vector<1x1x256xf32>
    %97 = vector.shape_cast %96 : vector<1x1x256xf32> to vector<1x256xf32>
    %98 = vector.shape_cast %95 : vector<1x256xf32> to vector<1x1x256xf32>
    tpu.vector_store %arg6[%c0_47, %c2_48, %c0_49], %98 {strides = array<i32>} : memref<1x3x256xf32, #tpu.memory_space<vmem>>, vector<1x1x256xf32>,
    return
  }
  func.func @transform_0(%arg0: i32, %arg1: memref<17xf32, #tpu.memory_space<smem>>) -> (i32, i32, i32) {
    %c0_i32 = arith.constant 0 : i32
    %c0_i32_0 = arith.constant 0 : i32
    %c0_i32_1 = arith.constant 0 : i32
    return %arg0, %c0_i32, %c0_i32_0 : i32, i32, i32
  }
  func.func @transform_1(%arg0: i32, %arg1: memref<17xf32, #tpu.memory_space<smem>>) -> (i32, i32, i32) {
    %c0_i32 = arith.constant 0 : i32
    %c0_i32_0 = arith.constant 0 : i32
    %c0_i32_1 = arith.constant 0 : i32
    return %arg0, %c0_i32, %c0_i32_0 : i32, i32, i32
  }
  func.func @transform_2(%arg0: i32, %arg1: memref<17xf32, #tpu.memory_space<smem>>) -> (i32, i32) {
    %c0_i32 = arith.constant 0 : i32
    %c0_i32_0 = arith.constant 0 : i32
    %c0_i32_1 = arith.constant 0 : i32
    return %c0_i32, %c0_i32_0 : i32, i32
  }
  func.func @transform_3(%arg0: i32, %arg1: memref<17xf32, #tpu.memory_space<smem>>) -> (i32, i32) {
    %c0_i32 = arith.constant 0 : i32
    %c0_i32_0 = arith.constant 0 : i32
    %c0_i32_1 = arith.constant 0 : i32
    return %c0_i32, %c0_i32_0 : i32, i32
  }
  func.func @transform_4(%arg0: i32, %arg1: memref<17xf32, #tpu.memory_space<smem>>) -> (i32, i32, i32) {
    %c0_i32 = arith.constant 0 : i32
    %c0_i32_0 = arith.constant 0 : i32
    %c0_i32_1 = arith.constant 0 : i32
    return %arg0, %c0_i32, %c0_i32_0 : i32, i32, i32
  }
}

</mosaic_0001>

<llo_original>
// kernel: tpu_custom_call.1
$region0: #{tpu_custom_call.1}
  #allocation0 [shape = 'u32[]', space=smem, size = 0x4, offset = 0x4, fixed_abs, tag = 'smem constant byte address 0x4 - core index']
  #allocation1 [shape = 'u32[144,128]{1,0:T(1,128)}', space=vmem, size = 0x12000, scoped, tag = 'internal scratch']
  #allocation2 [shape = 's32[1]{0}', space=sflag, size = 0x4, scoped, tag = 'scoped memory for tpu_custom_call.1']
  #allocation3 [shape = 'u8[512]{0}', space=smem, size = 0x200, scoped, tag = 'prefetched SMEM operand 0']
  %s0 = inlined_call_operand.hbm [shape: f32[17], index: 0, kind: input, shape index: {}]
  %s1 = inlined_call_operand.hbm [shape: f32[2,4,64], index: 1, kind: input, shape index: {}]
  %s2 = inlined_call_operand.hbm [shape: f32[2,8,256], index: 2, kind: input, shape index: {}]
  %s3 = inlined_call_operand.hbm [shape: f32[64,256], index: 3, kind: input, shape index: {}]
  %s4 = inlined_call_operand.hbm [shape: f32[256,256], index: 4, kind: input, shape index: {}]
  %s5 = inlined_call_operand.vmem [shape: f32[2,3,256], index: 5, kind: output, shape index: {}]
  %s6 = sld [smem:[#allocation0]]
  $region65: #{tpu_custom_call.1} parent=0
    _
  %s8 = ssub.s32 1, %s6
  %s9 = scalar_select 0, %s8, %s6
  %11 = dma.hbm_to_smem %s0, 16, [#allocation3], [#allocation2]
  %12 = dma.done [#allocation2], 16
  %13 = sfence
  $region1: #{tpu_custom_call.1} parent=0
    #allocation4 [shape = 'u8[4096]{0}', space=vmem, size = 0x1000, scoped, tag = 'input window, operand 1']
    #allocation5 [shape = 's32[2]{0}', space=sflag, size = 0x8, scoped, tag = 'scoped memory for tpu_custom_call.1']
    #allocation6 [shape = 'u8[16384]{0}', space=vmem, size = 0x4000, scoped, tag = 'input window, operand 2']
    #allocation7 [shape = 's32[2]{0}', space=sflag, size = 0x8, scoped, tag = 'scoped memory for tpu_custom_call.1']
    #allocation8 [shape = 'u8[65536]{0}', space=vmem, size = 0x10000, scoped, tag = 'input window, operand 3, single buffered']
    #allocation9 [shape = 'u8[262144]{0}', space=vmem, size = 0x40000, scoped, tag = 'input window, operand 4, single buffered']
    #allocation10 [shape = 's32[1]{0}', space=sflag, size = 0x4, scoped, tag = 'scoped memory for tpu_custom_call.1']
    %14 = vsyncpa [#allocation5], 0
    %s15 = scalar_lea.sflag [#allocation5], 1
    %16 = vsyncpa %s15, 0
    %17 = vsyncpa [#allocation7], 0
    %s18 = scalar_lea.sflag [#allocation7], 1
    %19 = vsyncpa %s18, 0
    %20 = vsyncpa [#allocation10], 0
    loop: start=0, step=1, limit=4
    $region2: #{tpu_custom_call.1} parent=1 // loop_pre_header
      _
    $region3: #{tpu_custom_call.1} parent=1 // loop_header
      %s22 = sphi 0, %s26
      %p23 = scmp.ge.s32.totalorder %s22, 4
      %s32 = sphi 0, %s34
      %s35 = sphi 0, %s32
      %s36 = sphi 0, %s35
      %s52 = sphi 0, %s36
      %s58 = sphi 0, %s60
      %s61 = sphi 0, %s58
      %s62 = sphi 0, %s61
      %s78 = sphi 0, %s62
      %s82 = sphi 0, %s82
      %s84 = sphi 0, %s82
      %s85 = sphi 0, %s84
      %s99 = sphi 0, %s85
      %s103 = sphi 0, %s103
      %s105 = sphi 0, %s103
      %s106 = sphi 0, %s105
      %s120 = sphi 0, %s106
      %s126 = sphi 0, %s128
      %s129 = sphi 0, %s126
      %s130 = sphi 0, %s129
      %s146 = sphi 0, %s130
    $region4: #{tpu_custom_call.1} parent=1 // loop_header_branch
      %25 = sbr.rel (%p23) target = $region8
    $region5: #{tpu_custom_call.1} parent=1 // loop_body
      %s27 = ssub.s32 %s22, 1
      %s28 = ssub.s32 %s22, 2
      %s29 = sadd.s32 %s22, 1
      %s30 = ssub.s32 %s22, %s29
      %p31 = scmp.eq.s32.totalorder %s30, 0
      %s33 = sadd.s32 %s32, 1
      %s34 = scalar_select %p31, %s32, %s33
      %p37 = pneg %p31
      %p38 = scmp.eq.s32.totalorder %s22, 1
      %p39 = por %p37, %p38
      %p40 = scmp.ne.s32.totalorder %s32, %s35
      %p41 = scmp.eq.s32.totalorder %s22, 0
      %p42 = por %p40, %p41
      %p43 = scmp.ne.s32.totalorder %s32, %s35
      %p44 = scmp.eq.s32.totalorder %s27, 1
      %p45 = por %p43, %p44
      %p46 = scmp.ne.s32.totalorder %s35, %s36
      %p47 = scmp.eq.s32.totalorder %s27, 0
      %p48 = por %p46, %p47
      %p49 = scmp.ne.s32.totalorder %s35, %s36
      %p50 = scmp.eq.s32.totalorder %s28, 1
      %p51 = por %p49, %p50
      %p53 = scmp.ne.s32.totalorder %s36, %s52
      %p54 = scmp.eq.s32.totalorder %s28, 0
      %p55 = por %p53, %p54
      %s56 = ssub.s32 %s22, %s29
      %p57 = scmp.eq.s32.totalorder %s56, 0
      %s59 = sadd.s32 %s58, 1
      %s60 = scalar_select %p57, %s58, %s59
      %p63 = pneg %p57
      %p64 = scmp.eq.s32.totalorder %s22, 1
      %p65 = por %p63, %p64
      %p66 = scmp.ne.s32.totalorder %s58, %s61
      %p67 = scmp.eq.s32.totalorder %s22, 0
      %p68 = por %p66, %p67
      %p69 = scmp.ne.s32.totalorder %s58, %s61
      %p70 = scmp.eq.s32.totalorder %s27, 1
      %p71 = por %p69, %p70
      %p72 = scmp.ne.s32.totalorder %s61, %s62
      %p73 = scmp.eq.s32.totalorder %s27, 0
      %p74 = por %p72, %p73
      %p75 = scmp.ne.s32.totalorder %s61, %s62
      %p76 = scmp.eq.s32.totalorder %s28, 1
      %p77 = por %p75, %p76
      %p79 = scmp.ne.s32.totalorder %s62, %s78
      %p80 = scmp.eq.s32.totalorder %s28, 0
      %p81 = por %p79, %p80
      %s83 = sadd.s32 %s82, 1
      %p86 = scmp.eq.s32.totalorder %s22, 1
      %p87 = scmp.ne.s32.totalorder %s82, %s84
      %p88 = scmp.eq.s32.totalorder %s22, 0
      %p89 = por %p87, %p88
      %p90 = scmp.ne.s32.totalorder %s82, %s84
      %p91 = scmp.eq.s32.totalorder %s27, 1
      %p92 = por %p90, %p91
      %p93 = scmp.ne.s32.totalorder %s84, %s85
      %p94 = scmp.eq.s32.totalorder %s27, 0
      %p95 = por %p93, %p94
      %p96 = scmp.ne.s32.totalorder %s84, %s85
      %p97 = scmp.eq.s32.totalorder %s28, 1
      %p98 = por %p96, %p97
      %p100 = scmp.ne.s32.totalorder %s85, %s99
      %p101 = scmp.eq.s32.totalorder %s28, 0
      %p102 = por %p100, %p101
      %s104 = sadd.s32 %s103, 1
      %p107 = scmp.eq.s32.totalorder %s22, 1
      %p108 = scmp.ne.s32.totalorder %s103, %s105
      %p109 = scmp.eq.s32.totalorder %s22, 0
      %p110 = por %p108, %p109
      %p111 = scmp.ne.s32.totalorder %s103, %s105
      %p112 = scmp.eq.s32.totalorder %s27, 1
      %p113 = por %p111, %p112
      %p114 = scmp.ne.s32.totalorder %s105, %s106
      %p115 = scmp.eq.s32.totalorder %s27, 0
      %p116 = por %p114, %p115
      %p117 = scmp.ne.s32.totalorder %s105, %s106
      %p118 = scmp.eq.s32.totalorder %s28, 1
      %p119 = por %p117, %p118
      %p121 = scmp.ne.s32.totalorder %s106, %s120
      %p122 = scmp.eq.s32.totalorder %s28, 0
      %p123 = por %p121, %p122
      %s124 = ssub.s32 %s22, %s29
      %p125 = scmp.eq.s32.totalorder %s124, 0
      %s127 = sadd.s32 %s126, 1
      %s128 = scalar_select %p125, %s126, %s127
      %p131 = pneg %p125
      %p132 = scmp.eq.s32.totalorder %s22, 1
      %p133 = por %p131, %p132
      %p134 = scmp.ne.s32.totalorder %s126, %s129
      %p135 = scmp.eq.s32.totalorder %s22, 0
      %p136 = por %p134, %p135
      %p137 = scmp.ne.s32.totalorder %s126, %s129
      %p138 = scmp.eq.s32.totalorder %s27, 1
      %p139 = por %p137, %p138
      %p140 = scmp.ne.s32.totalorder %s129, %s130
      %p141 = scmp.eq.s32.totalorder %s27, 0
      %p142 = por %p140, %p141
      %p143 = scmp.ne.s32.totalorder %s129, %s130
      %p144 = scmp.eq.s32.totalorder %s28, 1
      %p145 = por %p143, %p144
      %p147 = scmp.ne.s32.totalorder %s130, %s146
      %p148 = scmp.eq.s32.totalorder %s28, 0
      %p149 = por %p147, %p148
      %p150 = scmp.le.s32.totalorder 1, %s22
      %p151 = scmp.lt.s32.totalorder %s22, 3
      %p152 = pnand %p150, %p151
      %p153 = pneg %p152
      // Predicated region
      $region9: #{tpu_custom_call.1} parent=5 // pred_check
        _
      $region10: #{tpu_custom_call.1} parent=5 // pred_check_branch
        %155 = sbr.rel (%p152) target = $region12
      $region11: #{tpu_custom_call.1} parent=5 // pred_region
        %s156 = ssub.s32 %s22, 1
        // Predicated region
        $region13: #{tpu_custom_call.1} parent=11 // pred_check
          %p157 = pneg %p95
        $region14: #{tpu_custom_call.1} parent=11 // pred_check_branch
          %159 = sbr.rel (%p157) target = $region16
        $region15: #{tpu_custom_call.1} parent=11 // pred_region
          %s161 = ssub.s32 2048, 2048
          %162 = vsyncadd [#allocation7], %s161
          %s163 = sshll.u32 [#allocation8], 4
          %s164 = int_to_ptr.vmem [resolvable:$true] %s163
          %169 = dma.hbm_to_vmem [thread:$0]  %s3, 2048, %s164, [#allocation7], 256, 256, 16
        $region16: #{tpu_custom_call.1} parent=11 // pred_fallthru
          _
        // Predicated region
        $region17: #{tpu_custom_call.1} parent=11 // pred_check
          %p170 = pneg %p116
        $region18: #{tpu_custom_call.1} parent=11 // pred_check_branch
          %172 = sbr.rel (%p170) target = $region20
        $region19: #{tpu_custom_call.1} parent=11 // pred_region
          %s174 = ssub.s32 8192, 8192
          %175 = vsyncadd [#allocation10], %s174
          %s176 = sshll.u32 [#allocation9], 4
          %s177 = int_to_ptr.vmem [resolvable:$true] %s176
          %182 = dma.hbm_to_vmem [thread:$0]  %s4, 8192, %s177, [#allocation10], 256, 256, 16
        $region20: #{tpu_custom_call.1} parent=11 // pred_fallthru
          _
      $region12: #{tpu_custom_call.1} parent=5 // pred_fallthru
        _
      %p183 = scmp.lt.s32.totalorder %s22, 2
      // Predicated region
      $region21: #{tpu_custom_call.1} parent=5 // pred_check
        %p184 = pneg %p183
      $region22: #{tpu_custom_call.1} parent=5 // pred_check_branch
        %186 = sbr.rel (%p184) target = $region24
      $region23: #{tpu_custom_call.1} parent=5 // pred_region
        // Predicated region
        $region25: #{tpu_custom_call.1} parent=23 // pred_check
          %p187 = pneg %p42
        $region26: #{tpu_custom_call.1} parent=23 // pred_check_branch
          %189 = sbr.rel (%p187) target = $region28
        $region27: #{tpu_custom_call.1} parent=23 // pred_region
          %s190 = sand.u32 %s32, 1
          %s191 = scalar_lea.sflag [#allocation5], %s190
          %s192 = sand.u32 %s32, 1
          %s193 = smul.addr %s192, 4
          %s194 = scalar_lea.vmem [#allocation4], %s193
          %s196 = ssub.s32 64, 64
          %197 = vsyncadd %s191, %s196
          %s198 = smul.addr %s22, 64
          %s199 = scalar_lea.hbm %s1, %s198
          %s201 = sshll.u32 %s194, 4
          %s202 = int_to_ptr.vmem [resolvable:$true] %s201
          %204 = dma.hbm_to_vmem [thread:$0]  %s199, 64, %s202, %s191
        $region28: #{tpu_custom_call.1} parent=23 // pred_fallthru
          _
        // Predicated region
        $region29: #{tpu_custom_call.1} parent=23 // pred_check
          %p205 = pneg %p68
        $region30: #{tpu_custom_call.1} parent=23 // pred_check_branch
          %207 = sbr.rel (%p205) target = $region32
        $region31: #{tpu_custom_call.1} parent=23 // pred_region
          %s208 = sand.u32 %s22, 1
          %s209 = scalar_lea.sflag [#allocation7], %s208
          %s210 = sand.u32 %s58, 1
          %s211 = smul.addr %s210, 16
          %s212 = scalar_lea.vmem [#allocation6], %s211
          %s214 = ssub.s32 256, 256
          %215 = vsyncadd %s209, %s214
          %s216 = smul.addr %s22, 2
          %s217 = smul.addr %s216, 128
          %s218 = scalar_lea.hbm %s2, %s217
          %s220 = sshll.u32 %s212, 4
          %s221 = int_to_ptr.vmem [resolvable:$true] %s220
          %223 = dma.hbm_to_vmem [thread:$0]  %s218, 256, %s221, %s209
        $region32: #{tpu_custom_call.1} parent=23 // pred_fallthru
          _
      $region24: #{tpu_custom_call.1} parent=5 // pred_fallthru
        _
      %p224 = scmp.le.s32.totalorder 1, %s22
      %p225 = scmp.lt.s32.totalorder %s22, 3
      %p226 = pnand %p224, %p225
      %p227 = pneg %p226
      // Predicated region
      $region33: #{tpu_custom_call.1} parent=5 // pred_check
        _
      $region34: #{tpu_custom_call.1} parent=5 // pred_check_branch
        %229 = sbr.rel (%p226) target = $region36
      $region35: #{tpu_custom_call.1} parent=5 // pred_region
        %s230 = ssub.s32 %s22, 1
        %s231 = sand.u32 %s35, 1
        %s232 = scalar_lea.sflag [#allocation5], %s231
        %s233 = sand.u32 %s35, 1
        %s234 = smul.addr %s233, 4
        %s235 = scalar_lea.vmem [#allocation4], %s234
        // Predicated region
        $region37: #{tpu_custom_call.1} parent=35 // pred_check
          %p236 = pneg %p48
        $region38: #{tpu_custom_call.1} parent=35 // pred_check_branch
          %238 = sbr.rel (%p236) target = $region40
        $region39: #{tpu_custom_call.1} parent=35 // pred_region
          %239 = dma.done %s232, 64
        $region40: #{tpu_custom_call.1} parent=35 // pred_fallthru
          _
        %s240 = sand.u32 %s27, 1
        %s241 = scalar_lea.sflag [#allocation7], %s240
        %s242 = sand.u32 %s61, 1
        %s243 = smul.addr %s242, 16
        %s244 = scalar_lea.vmem [#allocation6], %s243
        // Predicated region
        $region41: #{tpu_custom_call.1} parent=35 // pred_check
          %p245 = pneg %p74
        $region42: #{tpu_custom_call.1} parent=35 // pred_check_branch
          %247 = sbr.rel (%p245) target = $region44
        $region43: #{tpu_custom_call.1} parent=35 // pred_region
          %248 = dma.done %s241, 256
        $region44: #{tpu_custom_call.1} parent=35 // pred_fallthru
          _
        // Predicated region
        $region45: #{tpu_custom_call.1} parent=35 // pred_check
          %p249 = pneg %p95
        $region46: #{tpu_custom_call.1} parent=35 // pred_check_branch
          %251 = sbr.rel (%p249) target = $region48
        $region47: #{tpu_custom_call.1} parent=35 // pred_region
          %252 = dma.done [#allocation7], 2048
        $region48: #{tpu_custom_call.1} parent=35 // pred_fallthru
          _
        // Predicated region
        $region49: #{tpu_custom_call.1} parent=35 // pred_check
          %p253 = pneg %p116
        $region50: #{tpu_custom_call.1} parent=35 // pred_check_branch
          %255 = sbr.rel (%p253) target = $region52
        $region51: #{tpu_custom_call.1} parent=35 // pred_region
          %256 = dma.done [#allocation10], 8192
        $region52: #{tpu_custom_call.1} parent=35 // pred_fallthru
          _
        %s257 = sand.u32 %s35, 1
        %s258 = scalar_lea.sflag [#allocation5], %s257
        %s259 = sand.u32 %s35, 1
        %s260 = smul.addr %s259, 4
        %s261 = scalar_lea.vmem [#allocation4], %s260
        %p262 = pneg %p48
        %p263 = pneg %p45
        %s264 = sand.u32 %s27, 1
        %s265 = scalar_lea.sflag [#allocation7], %s264
        %s266 = sand.u32 %s61, 1
        %s267 = smul.addr %s266, 16
        %s268 = scalar_lea.vmem [#allocation6], %s267
        %p269 = pneg %p74
        %p270 = pneg %p71
        %p271 = pneg %p95
        %p272 = pneg %p92
        %p273 = pneg %p116
        %p274 = pneg %p113
        %p275 = pneg %p142
        %p276 = pneg %p139
        %p277 = scmp.lt.s32.totalorder %s27, 1
        %s278 = scalar_select %p277, %s27, 1
        %s279 = smul.addr %s278, 2
        %s280 = smul.addr %s279, 4
        %s281 = scalar_lea.vmem %s5, %s280
        %p282 = scmp.lt.s32.totalorder %s27, 1
        %s283 = scalar_select %p282, %s27, 1
        %s284 = smul.addr %s283, 2
        %s285 = smul.addr %s284, 4
        %s286 = scalar_lea.vmem %s5, %s285
        %s287 = sld [smem:[#allocation3 + $0x10]]
        %v288 = vstv %s287
        %s289 = sld [smem:[#allocation3 + $0xc]]
        %v290 = vstv %s289
        %s291 = sld [smem:[#allocation3]]
        %v292 = vld [vmem:[%s235] sm:$0x1]
        %v293 = vstv %s291
        %v294 = vmul.f32 %v293, %v292
        %v295 = vadd.f32 %v290, %v294
        %s296 = sld [smem:[#allocation3 + $0x1]]
        %v297 = vld [vmem:[%s235 + $0x1] sm:$0x1]
        %v298 = vstv %s296
        %v299 = vmul.f32 %v298, %v297
        %v300 = vadd.f32 %v295, %v299
        %s301 = sld [smem:[#allocation3 + $0x2]]
        %v302 = vld [vmem:[%s235 + $0x2] sm:$0x1]
        %v303 = vstv %s301
        %v304 = vmul.f32 %v303, %v302
        %v305 = vadd.f32 %v300, %v304
        %s306 = sld [smem:[#allocation3 + $0x3]]
        %v307 = vld [vmem:[%s235 + $0x3] sm:$0x1]
        %v308 = vstv %s306
        %v309 = vmul.f32 %v308, %v307
        %v310 = vadd.f32 %v305, %v309
        %v311 = vld [vmem:[#allocation8] sm:$0xff]
        %v312 = vld [vmem:[#allocation8 + $0x8] sm:$0xff]
        %v313 = vld [vmem:[#allocation8 + $0x10] sm:$0xff]
        %v314 = vld [vmem:[#allocation8 + $0x18] sm:$0xff]
        %v315 = vld [vmem:[#allocation8 + $0x20] sm:$0xff]
        %v316 = vld [vmem:[#allocation8 + $0x28] sm:$0xff]
        %v317 = vld [vmem:[#allocation8 + $0x30] sm:$0xff]
        %v318 = vld [vmem:[#allocation8 + $0x38] sm:$0xff]
        %v319 = vld [vmem:[#allocation8 + $0x40] sm:$0xff]
        %v320 = vld [vmem:[#allocation8 + $0x48] sm:$0xff]
        %v321 = vld [vmem:[#allocation8 + $0x50] sm:$0xff]
        %v322 = vld [vmem:[#allocation8 + $0x58] sm:$0xff]
        %v323 = vld [vmem:[#allocation8 + $0x60] sm:$0xff]
        %v324 = vld [vmem:[#allocation8 + $0x68] sm:$0xff]
        %v325 = vld [vmem:[#allocation8 + $0x70] sm:$0xff]
        %v326 = vld [vmem:[#allocation8 + $0x78] sm:$0xff]
        %vm327 = vcmask 523264
        %v329 = vsel %vm327, %v310, 0
        %331 = vmatprep.subr.mxu0 %v312
        %332 = vmatpush1.msra.mxu0 %v311
        %333 = vmatprep.subr.mxu0 %v314
        %334 = vmatpush1.msra.mxu0 %v313
        %335 = vmatprep.subr.mxu0 %v316
        %336 = vmatpush1.msra.mxu0 %v315
        %337 = vmatprep.subr.mxu0 %v318
        %338 = vmatpush1.msra.mxu0 %v317
        %339 = vmatprep.subr.mxu0 %v320
        %340 = vmatpush1.msra.mxu0 %v319
        %341 = vmatprep.subr.mxu0 %v322
        %342 = vmatpush1.msra.mxu0 %v321
        %343 = vmatprep.subr.mxu0 %v324
        %344 = vmatpush1.msra.mxu0 %v323
        %345 = vmatprep.subr.mxu0 %v326
        %346 = vmatpush1.msra.mxu0 %v325
        %347 = vmatprep.subr.mxu0 0.0
        %348 = vmatpush1.msra.mxu0 0.0
        %349 = vmatprep.subr.mxu0 0.0
        %350 = vmatpush1.msra.mxu0 0.0
        %351 = vmatprep.subr.mxu0 0.0
        %352 = vmatpush1.msra.mxu0 0.0
        %353 = vmatprep.subr.mxu0 0.0
        %354 = vmatpush1.msra.mxu0 0.0
        %355 = vmatprep.subr.mxu0 0.0
        %356 = vmatpush1.msra.mxu0 0.0
        %357 = vmatprep.subr.mxu0 0.0
        %358 = vmatpush1.msra.mxu0 0.0
        %359 = vmatprep.subr.mxu0 0.0
        %360 = vmatpush1.msra.mxu0 0.0
        %361 = vmatprep.subr.mxu0 0.0
        %362 = vmatpush1.msra.mxu0 0.0
        %363 = vmatprep.subr.mxu0 0.0
        %364 = vmatpush1.msra.mxu0 0.0
        %365 = vmatprep.subr.mxu0 0.0
        %366 = vmatpush1.msra.mxu0 0.0
        %367 = vmatprep.subr.mxu0 0.0
        %368 = vmatpush1.msra.mxu0 0.0
        %369 = vmatprep.subr.mxu0 0.0
        %370 = vmatpush1.msra.mxu0 0.0
        %371 = vmatprep.subr.mxu0 0.0
        %372 = vmatpush1.msra.mxu0 0.0
        %373 = vmatprep.subr.mxu0 0.0
        %374 = vmatpush1.msra.mxu0 0.0
        %375 = vmatprep.subr.mxu0 0.0
        %376 = vmatpush1.msra.mxu0 0.0
        %377 = vmatprep.subr.mxu0 0.0
        %378 = vmatpush1.msra.mxu0 0.0
        %379 = vmatprep.subr.mxu0 0.0
        %380 = vmatpush1.msra.mxu0 0.0
        %381 = vmatprep.subr.mxu0 0.0
        %382 = vmatpush1.msra.mxu0 0.0
        %383 = vmatprep.subr.mxu0 0.0
        %384 = vmatpush1.msra.mxu0 0.0
        %385 = vmatprep.subr.mxu0 0.0
        %386 = vmatpush1.msra.mxu0 0.0
        %387 = vmatprep.subr.mxu0 0.0
        %388 = vmatpush1.msra.mxu0 0.0
        %389 = vmatprep.subr.mxu0 0.0
        %390 = vmatpush1.msra.mxu0 0.0
        %391 = vmatprep.subr.mxu0 0.0
        %392 = vmatpush1.msra.mxu0 0.0
        %393 = vmatprep.subr.mxu0 0.0
        %394 = vmatpush1.msra.mxu0 0.0
        %395 = vmatprep.mubr.f32.mxu0 0.0
        %396 = vmatmul.mubr.f32.gmra.mrb[0].mxu0 %v329
        %v397 = vpop.f32.mrb[0].mxu0
        %v398 = vadd.f32 0.0, %v397
        %v399 = vpop.f32.mrb[0].mxu0
        %v400 = vadd.f32 0.0, %v399
        %401 = vdwg.mxu0
        %v404 = vcombine.low %v398, %v400
        %v406 = vunpack.c.l.s4 1966171168
        %v407 = vunpack.c.0.s8 %v406
        %v408 = vlaneseq
        %v409 = vshrl.u32 %v408, 7
        %v410 = vsub.s32 %v407, %v409
        %v411 = vrot.slane %v404, %v410
        %v413 = vunpack.c.l.s4 1966171168
        %v414 = vunpack.c.0.s8 %v413
        %v415 = vlaneseq
        %v416 = vshrl.u32 %v415, 7
        %v417 = vsub.s32 %v414, %v416
        %v418 = vrot.slane %v411, %v417
        %v420 = vlaneseq
        %vm421 = vcmp.ge.s32.totalorder %v420, 0
        %vm422 = vcmp.lt.s32.totalorder %v420, 256
        %vm423 = vmand %vm421, %vm422
        %424 = vst.msk [vmem:[%s286] ss:$4 sm:$0x3] %vm423, %v418
        %s425 = sld [smem:[#allocation3 + $0xe]]
        %v426 = vstv %s425
        %v427 = vmul.f32 %v426, %v398
        %v428 = vmul.f32 %v426, %v400
        %v429 = vadd.f32 %v288, %v427
        %v430 = vadd.f32 %v288, %v428
        %s431 = sld [smem:[#allocation3 + $0xd]]
        %v432 = vstv %s431
        %s433 = sld [smem:[#allocation3 + $0x4]]
        %v434 = vld [vmem:[%s244] ss:$8 sm:$0x3]
        %v435 = vstv %s433
        %v436 = vmul.f32 %v435, %v434
        %v437 = vadd.f32 %v432, %v436
        %s438 = sld [smem:[#allocation3 + $0x5]]
        %s439 = scalar_lea.vmem %s244, 1 [#allocation6]
        %v440 = vld [vmem:[%s439] ss:$8 sm:$0x3]
        %v441 = vstv %s438
        %v442 = vmul.f32 %v441, %v440
        %v443 = vadd.f32 %v437, %v442
        %s444 = sld [smem:[#allocation3 + $0x6]]
        %s445 = scalar_lea.vmem %s244, 2 [#allocation6]
        %v446 = vld [vmem:[%s445] ss:$8 sm:$0x3]
        %v447 = vstv %s444
        %v448 = vmul.f32 %v447, %v446
        %v449 = vadd.f32 %v443, %v448
        %s450 = sld [smem:[#allocation3 + $0x7]]
        %s451 = scalar_lea.vmem %s244, 3 [#allocation6]
        %v452 = vld [vmem:[%s451] ss:$8 sm:$0x3]
        %v453 = vstv %s450
        %v454 = vmul.f32 %v453, %v452
        %v455 = vadd.f32 %v449, %v454
        %s456 = sld [smem:[#allocation3 + $0x8]]
        %s457 = scalar_lea.vmem %s244, 4 [#allocation6]
        %v458 = vld [vmem:[%s457] ss:$8 sm:$0x3]
        %v459 = vstv %s456
        %v460 = vmul.f32 %v459, %v458
        %v461 = vadd.f32 %v455, %v460
        %s462 = sld [smem:[#allocation3 + $0x9]]
        %s463 = scalar_lea.vmem %s244, 5 [#allocation6]
        %v464 = vld [vmem:[%s463] ss:$8 sm:$0x3]
        %v465 = vstv %s462
        %v466 = vmul.f32 %v465, %v464
        %v467 = vadd.f32 %v461, %v466
        %s468 = sld [smem:[#allocation3 + $0xa]]
        %s469 = scalar_lea.vmem %s244, 6 [#allocation6]
        %v470 = vld [vmem:[%s469] ss:$8 sm:$0x3]
        %v471 = vstv %s468
        %v472 = vmul.f32 %v471, %v470
        %v473 = vadd.f32 %v467, %v472
        %s474 = sld [smem:[#allocation3 + $0xb]]
        %s475 = scalar_lea.vmem %s244, 7 [#allocation6]
        %v476 = vld [vmem:[%s475] ss:$8 sm:$0x3]
        %v477 = vstv %s474
        %v478 = vmul.f32 %v477, %v476
        %v479 = vadd.f32 %v473, %v478
        %v480 = vld [vmem:[#allocation9] sm:$0xff]
        %v481 = vld [vmem:[#allocation9 + $0x8] sm:$0xff]
        %v482 = vld [vmem:[#allocation9 + $0x10] sm:$0xff]
        %v483 = vld [vmem:[#allocation9 + $0x18] sm:$0xff]
        %v484 = vld [vmem:[#allocation9 + $0x20] sm:$0xff]
        %v485 = vld [vmem:[#allocation9 + $0x28] sm:$0xff]
        %v486 = vld [vmem:[#allocation9 + $0x30] sm:$0xff]
        %v487 = vld [vmem:[#allocation9 + $0x38] sm:$0xff]
        %v488 = vld [vmem:[#allocation9 + $0x40] sm:$0xff]
        %v489 = vld [vmem:[#allocation9 + $0x48] sm:$0xff]
        %v490 = vld [vmem:[#allocation9 + $0x50] sm:$0xff]
        %v491 = vld [vmem:[#allocation9 + $0x58] sm:$0xff]
        %v492 = vld [vmem:[#allocation9 + $0x60] sm:$0xff]
        %v493 = vld [vmem:[#allocation9 + $0x68] sm:$0xff]
        %v494 = vld [vmem:[#allocation9 + $0x70] sm:$0xff]
        %v495 = vld [vmem:[#allocation9 + $0x78] sm:$0xff]
        %v496 = vld [vmem:[#allocation9 + $0x80] sm:$0xff]
        %v497 = vld [vmem:[#allocation9 + $0x88] sm:$0xff]
        %v498 = vld [vmem:[#allocation9 + $0x90] sm:$0xff]
        %v499 = vld [vmem:[#allocation9 + $0x98] sm:$0xff]
        %v500 = vld [vmem:[#allocation9 + $0xa0] sm:$0xff]
        %v501 = vld [vmem:[#allocation9 + $0xa8] sm:$0xff]
        %v502 = vld [vmem:[#allocation9 + $0xb0] sm:$0xff]
        %v503 = vld [vmem:[#allocation9 + $0xb8] sm:$0xff]
        %v504 = vld [vmem:[#allocation9 + $0xc0] sm:$0xff]
        %v505 = vld [vmem:[#allocation9 + $0xc8] sm:$0xff]
        %v506 = vld [vmem:[#allocation9 + $0xd0] sm:$0xff]
        %v507 = vld [vmem:[#allocation9 + $0xd8] sm:$0xff]
        %v508 = vld [vmem:[#allocation9 + $0xe0] sm:$0xff]
        %v509 = vld [vmem:[#allocation9 + $0xe8] sm:$0xff]
        %v510 = vld [vmem:[#allocation9 + $0xf0] sm:$0xff]
        %v511 = vld [vmem:[#allocation9 + $0xf8] sm:$0xff]
        %v512 = vld [vmem:[#allocation9 + $0x100] sm:$0xff]
        %v513 = vld [vmem:[#allocation9 + $0x108] sm:$0xff]
        %v514 = vld [vmem:[#allocation9 + $0x110] sm:$0xff]
        %v515 = vld [vmem:[#allocation9 + $0x118] sm:$0xff]
        %v516 = vld [vmem:[#allocation9 + $0x120] sm:$0xff]
        %v517 = vld [vmem:[#allocation9 + $0x128] sm:$0xff]
        %v518 = vld [vmem:[#allocation9 + $0x130] sm:$0xff]
        %v519 = vld [vmem:[#allocation9 + $0x138] sm:$0xff]
        %v520 = vld [vmem:[#allocation9 + $0x140] sm:$0xff]
        %v521 = vld [vmem:[#allocation9 + $0x148] sm:$0xff]
        %v522 = vld [vmem:[#allocation9 + $0x150] sm:$0xff]
        %v523 = vld [vmem:[#allocation9 + $0x158] sm:$0xff]
        %v524 = vld [vmem:[#allocation9 + $0x160] sm:$0xff]
        %v525 = vld [vmem:[#allocation9 + $0x168] sm:$0xff]
        %v526 = vld [vmem:[#allocation9 + $0x170] sm:$0xff]
        %v527 = vld [vmem:[#allocation9 + $0x178] sm:$0xff]
        %v528 = vld [vmem:[#allocation9 + $0x180] sm:$0xff]
        %v529 = vld [vmem:[#allocation9 + $0x188] sm:$0xff]
        %v530 = vld [vmem:[#allocation9 + $0x190] sm:$0xff]
        %v531 = vld [vmem:[#allocation9 + $0x198] sm:$0xff]
        %v532 = vld [vmem:[#allocation9 + $0x1a0] sm:$0xff]
        %v533 = vld [vmem:[#allocation9 + $0x1a8] sm:$0xff]
        %v534 = vld [vmem:[#allocation9 + $0x1b0] sm:$0xff]
        %v535 = vld [vmem:[#allocation9 + $0x1b8] sm:$0xff]
        %v536 = vld [vmem:[#allocation9 + $0x1c0] sm:$0xff]
        %v537 = vld [vmem:[#allocation9 + $0x1c8] sm:$0xff]
        %v538 = vld [vmem:[#allocation9 + $0x1d0] sm:$0xff]
        %v539 = vld [vmem:[#allocation9 + $0x1d8] sm:$0xff]
        %v540 = vld [vmem:[#allocation9 + $0x1e0] sm:$0xff]
        %v541 = vld [vmem:[#allocation9 + $0x1e8] sm:$0xff]
        %v542 = vld [vmem:[#allocation9 + $0x1f0] sm:$0xff]
        %v543 = vld [vmem:[#allocation9 + $0x1f8] sm:$0xff]
        %v545 = vlaneseq
        %v546 = vshrl.u32 %v545, 7
        %v547 = vsub.s32 0, %v546
        %v548 = vrot.slane %v479, %v547
        %v549 = vlaneseq
        %v550 = vshrl.u32 %v549, 7
        %v551 = vsub.s32 1, %v550
        %v552 = vrot.slane %v479, %v551
        %555 = vmatprep.subr.mxu0 %v481
        %556 = vmatpush1.msra.mxu0 %v480
        %557 = vmatprep.subr.mxu0 %v483
        %558 = vmatpush1.msra.mxu0 %v482
        %559 = vmatprep.subr.mxu0 %v485
        %560 = vmatpush1.msra.mxu0 %v484
        %561 = vmatprep.subr.mxu0 %v487
        %562 = vmatpush1.msra.mxu0 %v486
        %563 = vmatprep.subr.mxu0 %v489
        %564 = vmatpush1.msra.mxu0 %v488
        %565 = vmatprep.subr.mxu0 %v491
        %566 = vmatpush1.msra.mxu0 %v490
        %567 = vmatprep.subr.mxu0 %v493
        %568 = vmatpush1.msra.mxu0 %v492
        %569 = vmatprep.subr.mxu0 %v495
        %570 = vmatpush1.msra.mxu0 %v494
        %571 = vmatprep.subr.mxu0 %v497
        %572 = vmatpush1.msra.mxu0 %v496
        %573 = vmatprep.subr.mxu0 %v499
        %574 = vmatpush1.msra.mxu0 %v498
        %575 = vmatprep.subr.mxu0 %v501
        %576 = vmatpush1.msra.mxu0 %v500
        %577 = vmatprep.subr.mxu0 %v503
        %578 = vmatpush1.msra.mxu0 %v502
        %579 = vmatprep.subr.mxu0 %v505
        %580 = vmatpush1.msra.mxu0 %v504
        %581 = vmatprep.subr.mxu0 %v507
        %582 = vmatpush1.msra.mxu0 %v506
        %583 = vmatprep.subr.mxu0 %v509
        %584 = vmatpush1.msra.mxu0 %v508
        %585 = vmatprep.subr.mxu0 %v511
        %586 = vmatpush1.msra.mxu0 %v510
        %587 = vmatprep.subr.mxu0 %v513
        %588 = vmatpush1.msra.mxu0 %v512
        %589 = vmatprep.subr.mxu0 %v515
        %590 = vmatpush1.msra.mxu0 %v514
        %591 = vmatprep.subr.mxu0 %v517
        %592 = vmatpush1.msra.mxu0 %v516
        %593 = vmatprep.subr.mxu0 %v519
        %594 = vmatpush1.msra.mxu0 %v518
        %595 = vmatprep.subr.mxu0 %v521
        %596 = vmatpush1.msra.mxu0 %v520
        %597 = vmatprep.subr.mxu0 %v523
        %598 = vmatpush1.msra.mxu0 %v522
        %599 = vmatprep.subr.mxu0 %v525
        %600 = vmatpush1.msra.mxu0 %v524
        %601 = vmatprep.subr.mxu0 %v527
        %602 = vmatpush1.msra.mxu0 %v526
        %603 = vmatprep.subr.mxu0 %v529
        %604 = vmatpush1.msra.mxu0 %v528
        %605 = vmatprep.subr.mxu0 %v531
        %606 = vmatpush1.msra.mxu0 %v530
        %607 = vmatprep.subr.mxu0 %v533
        %608 = vmatpush1.msra.mxu0 %v532
        %609 = vmatprep.subr.mxu0 %v535
        %610 = vmatpush1.msra.mxu0 %v534
        %611 = vmatprep.subr.mxu0 %v537
        %612 = vmatpush1.msra.mxu0 %v536
        %613 = vmatprep.subr.mxu0 %v539
        %614 = vmatpush1.msra.mxu0 %v538
        %615 = vmatprep.subr.mxu0 %v541
        %616 = vmatpush1.msra.mxu0 %v540
        %617 = vmatprep.subr.mxu0 %v543
        %618 = vmatpush1.msra.mxu0 %v542
        %619 = vmatprep.mubr.f32.mxu0 %v552
        %620 = vmatmul.mubr.f32.gmra.mrb[0].mxu0 %v548
        %v621 = vpop.f32.mrb[0].mxu0
        %v622 = vadd.f32 0.0, %v621
        %v623 = vpop.f32.mrb[0].mxu0
        %v624 = vadd.f32 0.0, %v623
        %625 = vdwg.mxu0
        %v628 = vcombine.low %v622, %v624
        %v630 = vunpack.c.l.s4 1966171168
        %v631 = vunpack.c.0.s8 %v630
        %v632 = vlaneseq
        %v633 = vshrl.u32 %v632, 7
        %v634 = vsub.s32 %v631, %v633
        %v635 = vrot.slane %v628, %v634
        %v637 = vunpack.c.l.s4 1966171168
        %v638 = vunpack.c.0.s8 %v637
        %v639 = vlaneseq
        %v640 = vshrl.u32 %v639, 7
        %v641 = vsub.s32 %v638, %v640
        %v642 = vrot.slane %v635, %v641
        %s644 = scalar_lea.vmem %s286, 1
        %645 = vst.msk [vmem:[%s644] ss:$4 sm:$0x3] %vm423, %v642
        %s646 = sld [smem:[#allocation3 + $0xf]]
        %v647 = vstv %s646
        %v648 = vmul.f32 %v647, %v622
        %v649 = vmul.f32 %v647, %v624
        %v650 = vadd.f32 %v429, %v648
        %v651 = vadd.f32 %v430, %v649
        %v654 = vcombine.low %v650, %v651
        %v656 = vunpack.c.l.s4 1966171168
        %v657 = vunpack.c.0.s8 %v656
        %v658 = vlaneseq
        %v659 = vshrl.u32 %v658, 7
        %v660 = vsub.s32 %v657, %v659
        %v661 = vrot.slane %v654, %v660
        %v663 = vunpack.c.l.s4 1966171168
        %v664 = vunpack.c.0.s8 %v663
        %v665 = vlaneseq
        %v666 = vshrl.u32 %v665, 7
        %v667 = vsub.s32 %v664, %v666
        %v668 = vrot.slane %v661, %v667
        %s670 = scalar_lea.vmem %s286, 2
        %671 = vst.msk [vmem:[%s670] ss:$4 sm:$0x3] %vm423, %v668
        %p672 = scmp.lt.s32.totalorder %s27, 1
        %s673 = scalar_select %p672, %s27, 1
        %s674 = smul.addr %s673, 2
        %s675 = smul.addr %s674, 4
        %s676 = scalar_lea.vmem %s5, %s675
        // Predicated region
        $region53: #{tpu_custom_call.1} parent=35 // pred_check
          %p677 = pneg %p139
        $region54: #{tpu_custom_call.1} parent=35 // pred_check_branch
          %679 = sbr.rel (%p677) target = $region56
        $region55: #{tpu_custom_call.1} parent=35 // pred_region
          _
        $region56: #{tpu_custom_call.1} parent=35 // pred_fallthru
          _
      $region36: #{tpu_custom_call.1} parent=5 // pred_fallthru
        _
      %p680 = scmp.le.s32.totalorder 2, %s22
      // Predicated region
      $region57: #{tpu_custom_call.1} parent=5 // pred_check
        %p681 = pneg %p680
      $region58: #{tpu_custom_call.1} parent=5 // pred_check_branch
        %683 = sbr.rel (%p681) target = $region60
      $region59: #{tpu_custom_call.1} parent=5 // pred_region
        %s684 = ssub.s32 %s22, 2
        // Predicated region
        $region61: #{tpu_custom_call.1} parent=59 // pred_check
          %p685 = pneg %p145
        $region62: #{tpu_custom_call.1} parent=59 // pred_check_branch
          %687 = sbr.rel (%p685) target = $region64
        $region63: #{tpu_custom_call.1} parent=59 // pred_region
          %p688 = scmp.lt.s32.totalorder %s28, 1
          %s689 = scalar_select %p688, %s28, 1
          %s690 = smul.addr %s689, 2
          %s691 = smul.addr %s690, 4
          %s692 = scalar_lea.vmem %s5, %s691
        $region64: #{tpu_custom_call.1} parent=59 // pred_fallthru
          _
      $region60: #{tpu_custom_call.1} parent=5 // pred_fallthru
        _
    $region6: #{tpu_custom_call.1} parent=1 // loop_footer
      %s26 = sadd.s32 1, %s22
    $region7: #{tpu_custom_call.1} parent=1 // loop_footer_branch
      %21 = sbr.rel target = $region3
    $region8: #{tpu_custom_call.1} parent=1 // loop_exit
      _
    %693 = vsyncpa [#allocation5], 1
    %s694 = scalar_lea.sflag [#allocation5], 1
    %695 = vsyncpa %s694, 1
    %696 = vsyncpa [#allocation7], 1
    %s697 = scalar_lea.sflag [#allocation7], 1
    %698 = vsyncpa %s697, 1
    %699 = vsyncpa [#allocation10], 1

</llo_original>
